<compile_context>
chip_gen: v6e
topology: v6e:2x2x1
jax: 0.10.0
libtpu: 0.0.40
codegen_flags: <defaults>
</compile_context>

<pallas_src>
import math

import jax
import jax.numpy as jnp
from jax.experimental import pallas as pl
from jax.experimental.pallas import tpu as pltpu

IN_DIM = 6      # FEAT_DIM
D_MODEL = 128

_MAX_TILE_N = 2048  # upper bound on rows per grid step (multiple of 8)


def _round_up(x, m):
    return ((x + m - 1) // m) * m


def _hit_encoder_kernel(x_ref, w_ref, b_ref, o_ref):
    # x_ref: [tile_n, IN_DIM]  w_ref: [IN_DIM, D_MODEL]  b_ref: [1, D_MODEL]
    # MXU matmul with f32 accumulation; bias is already f32.
    y = jnp.dot(x_ref[...], w_ref[...], preferred_element_type=jnp.float32)
    y = y + b_ref[...]
    # SiLU / swish: y * sigmoid(y)  (exp goes to the EUP slot).
    o_ref[...] = (y * jax.nn.sigmoid(y)).astype(o_ref.dtype)


def _pick_tile(n, max_tile):
    """Balanced, 8-aligned row tile: minimizes padding while keeping the
    per-step block <= max_tile rows."""
    max_tile = max(8, _round_up(int(max_tile), 8))
    n_aligned = _round_up(max(n, 1), 8)
    if n_aligned <= max_tile:
        return n_aligned
    num_steps = pl.cdiv(n_aligned, max_tile)
    return _round_up(pl.cdiv(n_aligned, num_steps), 8)


def hit_encoder(x, w, b, *, max_tile_n=_MAX_TILE_N, out_dtype=None):
    """x: [..., IN_DIM] -> SiLU(x @ w + b): [..., D_MODEL].

    w: [IN_DIM, D_MODEL] (transposed vs. torch nn.Linear's [out, in]).
    b: [D_MODEL].
    """
    orig_shape = x.shape
    in_dim, d_model = w.shape
    assert orig_shape[-1] == in_dim
    if out_dtype is None:
        out_dtype = x.dtype

    n = int(math.prod(orig_shape[:-1])) if len(orig_shape) > 1 else 1
    x2d = x.reshape(n, in_dim)
    b2d = b.reshape(1, d_model).astype(jnp.float32)

    tile_n = _pick_tile(n, max_tile_n)

    # Pad rows so every grid step sees a full, unmasked block.
    n_pad = _round_up(max(n, 1), tile_n)
    if n_pad != n:
        x2d = jnp.pad(x2d, ((0, n_pad - n), (0, 0)))

    grid = (n_pad // tile_n,)

    cost = pl.CostEstimate(
        flops=2 * n_pad * in_dim * d_model,
        transcendentals=n_pad * d_model,
        bytes_accessed=(
            n_pad * in_dim * x2d.dtype.itemsize
            + n_pad * d_model * jnp.dtype(out_dtype).itemsize
            + w.size * w.dtype.itemsize
            + d_model * 4
        ),
    )

    out = pl.pallas_call(
        _hit_encoder_kernel,
        out_shape=jax.ShapeDtypeStruct((n_pad, d_model), out_dtype),
        grid_spec=pltpu.PrefetchScalarGridSpec(
            num_scalar_prefetch=0,
            grid=grid,
            in_specs=[
                # Rows tiled over the grid; feature dim is the full extent (6).
                pl.BlockSpec((tile_n, in_dim), lambda i: (i, 0)),
                # Weight and bias resident (constant block index) every step.
                pl.BlockSpec((in_dim, d_model), lambda i: (0, 0)),
                pl.BlockSpec((1, d_model), lambda i: (0, 0)),
            ],
            out_specs=pl.BlockSpec((tile_n, d_model), lambda i: (i, 0)),
        ),
        compiler_params=pltpu.CompilerParams(
            dimension_semantics=("parallel",),
            vmem_limit_bytes=64 * 1024 * 1024,
        ),
        cost_estimate=cost,
    )(x2d, w, b2d)

    if n_pad != n:
        out = out[:n]
    return out.reshape(*orig_shape[:-1], d_model)


def init_params(key, in_dim=IN_DIM, d_model=D_MODEL):
    """Deterministic nn.Linear-style init (uniform(-1/sqrt(in), 1/sqrt(in)))."""
    kw, kb = jax.random.split(key)
    bound = 1.0 / (in_dim ** 0.5)
    # Stored as [in_dim, d_model] (transposed relative to torch's [out, in]).
    w = jax.random.uniform(kw, (in_dim, d_model), jnp.float32, -bound, bound)
    b = jax.random.uniform(kb, (d_model,), jnp.float32, -bound, bound)
    return w, b


if __name__ == "__main__":
    key = jax.random.PRNGKey(0)
    k_x, k_p = jax.random.split(key)

    batch, seq = 2, 8
    x = jax.random.normal(k_x, (batch, seq, IN_DIM), jnp.float32)
    w, b = init_params(k_p)

    out = hit_encoder(x, w, b)
    out = jax.block_until_ready(out)

    # Reference check in plain JAX.
    y_ref = x @ w + b
    ref = y_ref * jax.nn.sigmoid(y_ref)
    assert out.shape == (batch, seq, D_MODEL)
    assert jnp.allclose(out, ref, atol=1e-5, rtol=1e-5)

    # Also exercise the padded / multi-step-grid path with a non-tile-aligned N.
    batch2, seq2 = 3, 700  # N = 2100 -> 2 balanced steps of 1056 rows (12 pad)
    x2 = jax.random.normal(k_x, (batch2, seq2, IN_DIM), jnp.float32)
    out2 = jax.block_until_ready(hit_encoder(x2, w, b))
    y_ref2 = x2 @ w + b
    ref2 = y_ref2 * jax.nn.sigmoid(y_ref2)
    assert out2.shape == (batch2, seq2, D_MODEL)
    assert jnp.allclose(out2, ref2, atol=1e-5, rtol=1e-5)

    print("KERNEL_OK")
</pallas_src>

<mosaic_0001>
module attributes {stable_mosaic.version = 11 : i64} {
  func.func @_hit_encoder_kernel(%arg0: i32, %arg1: memref<16x6xf32, #tpu.memory_space<vmem>>, %arg2: memref<6x128xf32, #tpu.memory_space<vmem>>, %arg3: memref<1x128xf32, #tpu.memory_space<vmem>>, %arg4: memref<16x128xf32, #tpu.memory_space<vmem>>) attributes {dimension_semantics = [#tpu.dimension_semantics<parallel>], iteration_bounds = array<i64: 1>, scalar_prefetch = 0 : i64, scratch_operands = 0 : i64, tpu.core_type = #tpu.core_type<tc>, window_params = [{transform_indices = @transform_0, window_bounds = array<i64: 16, 6>}, {pipeline_mode = #tpu.pipeline_mode<synchronous>, transform_indices = @transform_1, window_bounds = array<i64: 6, 128>}, {pipeline_mode = #tpu.pipeline_mode<synchronous>, transform_indices = @transform_2, window_bounds = array<i64: 1, 128>}, {transform_indices = @transform_3, window_bounds = array<i64: 16, 128>}]} {
    %c0 = arith.constant 0 : index
    %c0_0 = arith.constant 0 : index
    %0 = vector.load %arg1[%c0, %c0_0] : memref<16x6xf32, #tpu.memory_space<vmem>>, vector<16x6xf32>
    %c0_1 = arith.constant 0 : index
    %c0_2 = arith.constant 0 : index
    %1 = vector.load %arg2[%c0_1, %c0_2] : memref<6x128xf32, #tpu.memory_space<vmem>>, vector<6x128xf32>
    %cst = arith.constant dense<0.000000e+00> : vector<16x128xf32>
    %2 = tpu.matmul %0, %1, %cst {dimension_numbers = #tpu.dot_dimension_numbers<[1], [0], [0], [1], [0, 0, 1, 1], [], []>} : vector<16x6xf32>, vector<6x128xf32>, vector<16x128xf32> -> vector<16x128xf32>
    %c0_3 = arith.constant 0 : index
    %c0_4 = arith.constant 0 : index
    %3 = vector.load %arg3[%c0_3, %c0_4] : memref<1x128xf32, #tpu.memory_space<vmem>>, vector<1x128xf32>
    %4 = vector.broadcast %3 : vector<1x128xf32> to vector<16x128xf32>
    %5 = arith.addf %2, %4 : vector<16x128xf32>
    %6 = arith.negf %5 : vector<16x128xf32>
    %7 = math.exp %6 : vector<16x128xf32>
    %cst_5 = arith.constant 1.000000e+00 : f32
    %8 = vector.broadcast %cst_5 : f32 to vector<16x128xf32>
    %9 = arith.addf %8, %7 : vector<16x128xf32>
    %10 = arith.divf %8, %9 : vector<16x128xf32>
    %11 = arith.mulf %5, %10 : vector<16x128xf32>
    %c0_6 = arith.constant 0 : index
    %c0_7 = arith.constant 0 : index
    %12 = vector.load %arg4[%c0_6, %c0_7] : memref<16x128xf32, #tpu.memory_space<vmem>>, vector<16x128xf32>
    tpu.vector_store %arg4[%c0_6, %c0_7], %11 {strides = array<i32>} : memref<16x128xf32, #tpu.memory_space<vmem>>, vector<16x128xf32>,
    return
  }
  func.func @transform_0(%arg0: i32) -> (i32, i32) {
    %c0_i32 = arith.constant 0 : i32
    %c0_i32_0 = arith.constant 0 : i32
    return %arg0, %c0_i32 : i32, i32
  }
  func.func @transform_1(%arg0: i32) -> (i32, i32) {
    %c0_i32 = arith.constant 0 : i32
    %c0_i32_0 = arith.constant 0 : i32
    %c0_i32_1 = arith.constant 0 : i32
    return %c0_i32, %c0_i32_0 : i32, i32
  }
  func.func @transform_2(%arg0: i32) -> (i32, i32) {
    %c0_i32 = arith.constant 0 : i32
    %c0_i32_0 = arith.constant 0 : i32
    %c0_i32_1 = arith.constant 0 : i32
    return %c0_i32, %c0_i32_0 : i32, i32
  }
  func.func @transform_3(%arg0: i32) -> (i32, i32) {
    %c0_i32 = arith.constant 0 : i32
    %c0_i32_0 = arith.constant 0 : i32
    return %arg0, %c0_i32 : i32, i32
  }
}

</mosaic_0001>

<llo_original>
// kernel: tpu_custom_call.1
$region0: #{tpu_custom_call.1}
  #allocation0 [shape = 'u32[]', space=smem, size = 0x4, offset = 0x4, fixed_abs, tag = 'smem constant byte address 0x4 - core index']
  #allocation1 [shape = 'u32[144,128]{1,0:T(1,128)}', space=vmem, size = 0x12000, scoped, tag = 'internal scratch']
  %s0 = inlined_call_operand.vmem [shape: f32[16,6], index: 0, kind: input, shape index: {}]
  %s1 = inlined_call_operand.vmem [shape: f32[6,128], index: 1, kind: input, shape index: {}]
  %s2 = inlined_call_operand.vmem [shape: f32[1,128], index: 2, kind: input, shape index: {}]
  %s3 = inlined_call_operand.hbm [shape: f32[16,128], index: 3, kind: output, shape index: {}]
  %s4 = sld [smem:[#allocation0]]
  $region22: #{tpu_custom_call.1} parent=0
    _
  %s6 = ssub.s32 1, %s4
  %s7 = scalar_select 0, %s6, %s4
  $region1: #{tpu_custom_call.1} parent=0
    #allocation2 [shape = 'u8[8192]{0}', space=vmem, size = 0x2000, scoped, tag = 'output window, operand 0, single buffered']
    #allocation3 [shape = 's32[1]{0}', space=sflag, size = 0x4, scoped, tag = 'scoped memory for tpu_custom_call.1']
    %8 = vsyncpa [#allocation3], 0
    // Predicated region
    $region2: #{tpu_custom_call.1} parent=1 // pred_check
      _
    $region3: #{tpu_custom_call.1} parent=1 // pred_check_branch
      %10 = sbr.rel (0) target = $region5
    $region4: #{tpu_custom_call.1} parent=1 // pred_region
      _
    $region5: #{tpu_custom_call.1} parent=1 // pred_fallthru
      _
    // Predicated region
    $region6: #{tpu_custom_call.1} parent=1 // pred_check
      _
    $region7: #{tpu_custom_call.1} parent=1 // pred_check_branch
      %12 = sbr.rel (0) target = $region9
    $region8: #{tpu_custom_call.1} parent=1 // pred_region
      _
    $region9: #{tpu_custom_call.1} parent=1 // pred_fallthru
      _
    // Predicated region
    $region10: #{tpu_custom_call.1} parent=1 // pred_check
      _
    $region11: #{tpu_custom_call.1} parent=1 // pred_check_branch
      %14 = sbr.rel (0) target = $region13
    $region12: #{tpu_custom_call.1} parent=1 // pred_region
      _
    $region13: #{tpu_custom_call.1} parent=1 // pred_fallthru
      _
    %v15 = vld [vmem:[%s0] sm:$0xff]
    %v16 = vld [vmem:[%s0 + $0x8] sm:$0xff]
    %v17 = vld [vmem:[%s1] sm:$0x3f]
    %v18 = vld [vmem:[%s2] sm:$0x1]
    %v20 = vlaneseq
    %v21 = vshrl.u32 %v20, 7
    %v22 = vsub.s32 0, %v21
    %v23 = vrot.slane %v18, %v22
    %vm25 = vcmask 48128
    %v27 = vsel %vm25, %v15, 0
    %v30 = vsel %vm25, %v16, 0
    %vm32 = vcmask 1045504
    %v34 = vsel %vm32, %v17, 0
    %36 = vmatprep.subr.mxu0 0.0
    %37 = vmatpush1.msra.mxu0 0.0
    %38 = vmatprep.subr.mxu0 0.0
    %39 = vmatpush1.msra.mxu0 0.0
    %40 = vmatprep.subr.mxu0 0.0
    %41 = vmatpush1.msra.mxu0 0.0
    %42 = vmatprep.subr.mxu0 0.0
    %43 = vmatpush1.msra.mxu0 0.0
    %44 = vmatprep.subr.mxu0 0.0
    %45 = vmatpush1.msra.mxu0 0.0
    %46 = vmatprep.subr.mxu0 0.0
    %47 = vmatpush1.msra.mxu0 0.0
    %48 = vmatprep.subr.mxu0 0.0
    %49 = vmatpush1.msra.mxu0 0.0
    %50 = vmatprep.subr.mxu0 0.0
    %51 = vmatpush1.msra.mxu0 0.0
    %52 = vmatprep.subr.mxu0 0.0
    %53 = vmatpush1.msra.mxu0 0.0
    %54 = vmatprep.subr.mxu0 0.0
    %55 = vmatpush1.msra.mxu0 0.0
    %56 = vmatprep.subr.mxu0 0.0
    %57 = vmatpush1.msra.mxu0 0.0
    %58 = vmatprep.subr.mxu0 0.0
    %59 = vmatpush1.msra.mxu0 0.0
    %60 = vmatprep.subr.mxu0 0.0
    %61 = vmatpush1.msra.mxu0 0.0
    %62 = vmatprep.subr.mxu0 0.0
    %63 = vmatpush1.msra.mxu0 0.0
    %64 = vmatprep.subr.mxu0 0.0
    %65 = vmatpush1.msra.mxu0 0.0
    %66 = vmatprep.subr.mxu0 0.0
    %67 = vmatpush1.msra.mxu0 %v34
    %68 = vmatprep.subr.mxu0 0.0
    %69 = vmatpush2.msra.mxu0 0.0
    %70 = vmatprep.subr.mxu0 0.0
    %71 = vmatpush2.msra.mxu0 0.0
    %72 = vmatprep.subr.mxu0 0.0
    %73 = vmatpush2.msra.mxu0 0.0
    %74 = vmatprep.subr.mxu0 0.0
    %75 = vmatpush2.msra.mxu0 0.0
    %76 = vmatprep.subr.mxu0 0.0
    %77 = vmatpush2.msra.mxu0 0.0
    %78 = vmatprep.subr.mxu0 0.0
    %79 = vmatpush2.msra.mxu0 0.0
    %80 = vmatprep.subr.mxu0 0.0
    %81 = vmatpush2.msra.mxu0 0.0
    %82 = vmatprep.subr.mxu0 0.0
    %83 = vmatpush2.msra.mxu0 0.0
    %84 = vmatprep.subr.mxu0 0.0
    %85 = vmatpush2.msra.mxu0 0.0
    %86 = vmatprep.subr.mxu0 0.0
    %87 = vmatpush2.msra.mxu0 0.0
    %88 = vmatprep.subr.mxu0 0.0
    %89 = vmatpush2.msra.mxu0 0.0
    %90 = vmatprep.subr.mxu0 0.0
    %91 = vmatpush2.msra.mxu0 0.0
    %92 = vmatprep.subr.mxu0 0.0
    %93 = vmatpush2.msra.mxu0 0.0
    %94 = vmatprep.subr.mxu0 0.0
    %95 = vmatpush2.msra.mxu0 0.0
    %96 = vmatprep.subr.mxu0 0.0
    %97 = vmatpush2.msra.mxu0 0.0
    %98 = vmatprep.subr.mxu0 0.0
    %99 = vmatpush2.msra.mxu0 0.0
    %100 = vmatprep.mubr.f32.mxu0 0.0
    %101 = vmatmul.mubr.f32.gmra.mxu0 %v27
    %v102 = vpop.f32.mrf.mxu0
    %v103 = vadd.f32 %v23, %v102
    %v104 = vpop.f32.mrf.mxu0
    %105 = vmatprep.mubr.f32.mxu0 0.0
    %106 = vmatmul.mubr.f32.gmra.mxu0 %v30
    %v107 = vpop.f32.mrf.mxu0
    %v108 = vadd.f32 %v23, %v107
    %v109 = vpop.f32.mrf.mxu0
    %110 = vdwg.mxu0
    %v111 = vxor.u32 %v103, 2147483648
    %v112 = vxor.u32 %v108, 2147483648
    %v113 = vmul.f32 %v111, 1.442695
    %v114 = vpow.pop %v113
    %v115 = vmul.f32 %v112, 1.442695
    %v116 = vpow.pop %v115
    %v117 = vadd.f32 %v114, 1.0
    %v118 = vadd.f32 %v116, 1.0
    %v119 = vrcp.pop %v117
    %v120 = vmul.f32 1.0, %v119
    %v121 = vrcp.pop %v118
    %v122 = vmul.f32 1.0, %v121
    %v123 = vmul.f32 %v103, %v120
    %v124 = vmul.f32 %v108, %v122
    %125 = vst [vmem:[#allocation2] sm:$0xff] %v123
    %126 = vst [vmem:[#allocation2 + $0x8] sm:$0xff] %v124
    // Predicated region
    $region14: #{tpu_custom_call.1} parent=1 // pred_check
      _
    $region15: #{tpu_custom_call.1} parent=1 // pred_check_branch
      %128 = sbr.rel (0) target = $region17
    $region16: #{tpu_custom_call.1} parent=1 // pred_region
      %s130 = ssub.s32 256, 256
      %131 = vsyncadd [#allocation3], %s130
      %s132 = sshll.u32 [#allocation2], 4
      %s133 = int_to_ptr.vmem [resolvable:$true] %s132
      %138 = dma.vmem_to_hbm [thread:$0]  %s133, 256, %s3, [#allocation3], 128, 128, 8
    $region17: #{tpu_custom_call.1} parent=1 // pred_fallthru
      _
    // Predicated region
    $region18: #{tpu_custom_call.1} parent=1 // pred_check
      _
    $region19: #{tpu_custom_call.1} parent=1 // pred_check_branch
      %140 = sbr.rel (0) target = $region21
    $region20: #{tpu_custom_call.1} parent=1 // pred_region
      %141 = dma.done [#allocation3], 256
    $region21: #{tpu_custom_call.1} parent=1 // pred_fallthru
      _
    %142 = vsyncpa [#allocation3], 1

</llo_original>
